<compile_context>
chip_gen: v7x
topology: tpu7x:2x2x1
jax: 0.10.0
libtpu: 0.0.40
codegen_flags: <defaults>
</compile_context>

<pallas_src>
import functools

import jax
import jax.numpy as jnp
from jax import lax
from jax.experimental import pallas as pl
from jax.experimental.pallas import tpu as pltpu


def _round_up(a, b):
    return ((a + b - 1) // b) * b


# ---------------------------------------------------------------------------
# Fast path kernel: fused im2col + matmul (stride == 1), one image per step.
# ---------------------------------------------------------------------------
def _conv_im2col_kernel(w_ref, b_ref, x_ref, o_ref, *, kh, kw, w_p, l_out):
    """o = W @ im2col(x) + b, patch matrix built entirely in VMEM.

    w_ref : (C_out, K)   flattened conv weight (replicated across grid)
    b_ref : (C_out, 1)   bias column (replicated)
    x_ref : (C_in, Lx)   one flattened (padded) image; Lx >= l_out + (kh-1)*w_p + kw-1
    o_ref : (C_out, L)   lane-dense flat output; L = h_out * w_p (columns with
                         x >= w_out are garbage and get sliced off in the wrapper)
    """
    taps = []
    for i in range(kh):
        for j in range(kw):
            d = i * w_p + j                       # static shifted lane slice
            taps.append(x_ref[:, d:d + l_out])    # (C_in, L)
    patches = jnp.concatenate(taps, axis=0)       # (K, L), stays in VMEM
    acc = jnp.dot(w_ref[...], patches, preferred_element_type=jnp.float32)
    o_ref[...] = (acc + b_ref[...]).astype(o_ref.dtype)


# ---------------------------------------------------------------------------
# Generic fallback kernel (wrapper-side im2col): o = W @ P + b on one band.
# ---------------------------------------------------------------------------
def _conv_matmul_kernel(w_ref, b_ref, p_ref, o_ref):
    acc = jnp.dot(w_ref[...], p_ref[...], preferred_element_type=jnp.float32)
    o_ref[...] = (acc + b_ref[...]).astype(o_ref.dtype)


def _downsample_generic(x_p, w_mat, b_col, kh, kw, stride, h_out, w_out, out_dtype):
    """Fallback for stride > 1 / oversized images: wrapper-side im2col."""
    # TODO(synk): stride > 1 keeps a wrapper-side im2col; not on the module's
    # default (kernel_size=3, stride=1, padding=0) path.
    n, c_in, h_p, w_p = x_p.shape
    c_out, k_dim = w_mat.shape
    m = n * h_out * w_out

    taps = []
    for i in range(kh):
        for j in range(kw):
            taps.append(lax.slice(
                x_p, (0, 0, i, j),
                (n, c_in,
                 i + (h_out - 1) * stride + 1,
                 j + (w_out - 1) * stride + 1),
                (1, 1, stride, stride)))                      # (N, C_in, Ho, Wo)
    patches = jnp.stack(taps, axis=0)                         # (KH*KW, N, C_in, Ho, Wo)
    patches = jnp.transpose(patches, (0, 2, 1, 3, 4)).reshape(k_dim, m)

    tm = min(8192, _round_up(m, 128))
    m_pad = _round_up(m, tm)
    if m_pad != m:
        patches = jnp.pad(patches, ((0, 0), (0, m_pad - m)))

    out_pad = pl.pallas_call(
        _conv_matmul_kernel,
        out_shape=jax.ShapeDtypeStruct((c_out, m_pad), out_dtype),
        grid_spec=pltpu.PrefetchScalarGridSpec(
            num_scalar_prefetch=0,
            grid=(m_pad // tm,),
            in_specs=[
                pl.BlockSpec((c_out, k_dim), lambda i: (0, 0)),
                pl.BlockSpec((c_out, 1), lambda i: (0, 0)),
                pl.BlockSpec((k_dim, tm), lambda i: (0, i)),
            ],
            out_specs=pl.BlockSpec((c_out, tm), lambda i: (0, i)),
        ),
        compiler_params=pltpu.CompilerParams(dimension_semantics=("parallel",)),
    )(w_mat, b_col, patches)

    out = out_pad[:, :m].reshape(c_out, n, h_out, w_out)
    return jnp.transpose(out, (1, 0, 2, 3))


# ---------------------------------------------------------------------------
# Public forward: nn.Conv2d(ch_in, ch_out, k, stride, padding) on NCHW input.
# ---------------------------------------------------------------------------
def downsample_forward(x_nchw, weight, bias, *, stride=1, padding=0):
    """x_nchw: (N, C_in, H, W); weight: (C_out, C_in, KH, KW); bias: (C_out,)."""
    n, c_in, h, w = x_nchw.shape
    c_out, c_in_w, kh, kw = weight.shape
    assert c_in == c_in_w
    h_out = (h + 2 * padding - kh) // stride + 1
    w_out = (w + 2 * padding - kw) // stride + 1
    k_dim = kh * kw * c_in

    # Weight (C_out, C_in, KH, KW) -> (C_out, KH, KW, C_in) -> (C_out, K) so the
    # row ordering (tap-major, then c_in) matches the in-kernel patch rows.
    w_mat = jnp.transpose(weight, (0, 2, 3, 1)).reshape(c_out, k_dim)
    b_col = bias.reshape(c_out, 1).astype(jnp.float32)

    h_p, w_p = h + 2 * padding, w + 2 * padding
    l_out = h_out * w_p                 # flat output positions computed per image
    lx = (h_p + 1) * w_p                # +1 zero row so every tap slice stays in bounds

    # Per-step VMEM footprint estimate (x band x2 buffers + VMEM patch matrix + out x2).
    fast_bytes = 4 * (2 * c_in * lx + k_dim * l_out + 2 * c_out * l_out)
    use_fast = (stride == 1) and (fast_bytes < (10 << 20))

    if not use_fast:
        x_p = x_nchw
        if padding:
            x_p = jnp.pad(x_p, ((0, 0), (0, 0),
                                (padding, padding), (padding, padding)))
        return _downsample_generic(x_p, w_mat, b_col, kh, kw, stride,
                                   h_out, w_out, x_nchw.dtype)

    # Single input-sized pad: conv spatial padding + one extra zero row at the bottom
    # so the largest tap offset d = (kh-1)*w_p + kw-1 never slices out of bounds.
    x_p = jnp.pad(x_nchw, ((0, 0), (0, 0),
                           (padding, padding + 1), (padding, padding)))
    x_flat = x_p.reshape(n, c_in, lx)   # contiguous reshape (no data movement)

    kernel = functools.partial(_conv_im2col_kernel,
                               kh=kh, kw=kw, w_p=w_p, l_out=l_out)

    out_flat = pl.pallas_call(
        kernel,
        out_shape=jax.ShapeDtypeStruct((n, c_out, l_out), x_nchw.dtype),
        grid_spec=pltpu.PrefetchScalarGridSpec(
            num_scalar_prefetch=0,
            grid=(n,),
            in_specs=[
                pl.BlockSpec((c_out, k_dim), lambda b: (0, 0)),      # W (replicated)
                pl.BlockSpec((c_out, 1), lambda b: (0, 0)),          # bias (replicated)
                pl.BlockSpec((None, c_in, lx), lambda b: (b, 0, 0)),  # one flat image
            ],
            out_specs=pl.BlockSpec((None, c_out, l_out), lambda b: (b, 0, 0)),
        ),
        compiler_params=pltpu.CompilerParams(
            dimension_semantics=("parallel",)),
        cost_estimate=pl.CostEstimate(
            flops=2 * n * c_out * k_dim * l_out,
            transcendentals=0,
            bytes_accessed=(x_flat.size + w_mat.size + n * c_out * l_out)
            * x_nchw.dtype.itemsize),
    )(w_mat, b_col, x_flat)

    # (N, C_out, H_out, W_p): already NCHW-ordered — just drop the garbage columns.
    return out_flat.reshape(n, c_out, h_out, w_p)[:, :, :, :w_out]


if __name__ == "__main__":
    key = jax.random.PRNGKey(0)
    k_x, k_w, k_b = jax.random.split(key, 3)

    # Small shapes consistent with the module: batch=2, ch_in=4, ch_out=8, 16x16 spatial.
    N, C_IN, C_OUT, H, W, K = 2, 4, 8, 16, 16, 3

    x = jax.random.normal(k_x, (N, C_IN, H, W), dtype=jnp.float32)
    weight = 0.1 * jax.random.normal(k_w, (C_OUT, C_IN, K, K), dtype=jnp.float32)
    bias = 0.1 * jax.random.normal(k_b, (C_OUT,), dtype=jnp.float32)

    def ref_conv(xx, ww, bb, stride, padding):
        return lax.conv_general_dilated(
            xx, ww, window_strides=(stride, stride),
            padding=((padding, padding), (padding, padding)),
            dimension_numbers=("NCHW", "OIHW", "NCHW"),
        ) + bb.reshape(1, -1, 1, 1)

    # Default module configuration (kernel_size=3, stride=1, padding=0): fast path.
    out = downsample_forward(x, weight, bias)
    out = jax.block_until_ready(out)
    ref = ref_conv(x, weight, bias, 1, 0)
    assert out.shape == (N, C_OUT, H - K + 1, W - K + 1)
    assert jnp.allclose(out, ref, atol=1e-4, rtol=1e-4)

    # padding=1 (same fused-im2col path, padded input).
    out_p = jax.block_until_ready(downsample_forward(x, weight, bias, padding=1))
    assert jnp.allclose(out_p, ref_conv(x, weight, bias, 1, 1), atol=1e-4, rtol=1e-4)

    # stride=2 (generic fallback path).
    out_s = jax.block_until_ready(downsample_forward(x, weight, bias, stride=2))
    assert jnp.allclose(out_s, ref_conv(x, weight, bias, 2, 0), atol=1e-4, rtol=1e-4)

    print("KERNEL_OK")
</pallas_src>

<mosaic_0001>
module attributes {stable_mosaic.version = 11 : i64} {
  func.func @_conv_im2col_kernel(%arg0: i32, %arg1: memref<8x36xf32, #tpu.memory_space<vmem>>, %arg2: memref<8x1xf32, #tpu.memory_space<vmem>>, %arg3: memref<1x4x272xf32, #tpu.memory_space<vmem>>, %arg4: memref<1x8x224xf32, #tpu.memory_space<vmem>>) attributes {dimension_semantics = [#tpu.dimension_semantics<parallel>], iteration_bounds = array<i64: 2>, scalar_prefetch = 0 : i64, scratch_operands = 0 : i64, tpu.core_type = #tpu.core_type<tc>, window_params = [{pipeline_mode = #tpu.pipeline_mode<synchronous>, transform_indices = @transform_0, window_bounds = array<i64: 8, 36>}, {pipeline_mode = #tpu.pipeline_mode<synchronous>, transform_indices = @transform_1, window_bounds = array<i64: 8, 1>}, {transform_indices = @transform_2, window_bounds = array<i64: 1, 4, 272>}, {transform_indices = @transform_3, window_bounds = array<i64: 1, 8, 224>}]} {
    %c0 = arith.constant 0 : index
    %c0_0 = arith.constant 0 : index
    %c0_1 = arith.constant 0 : index
    %0 = vector.load %arg3[%c0, %c0_0, %c0_1] : memref<1x4x272xf32, #tpu.memory_space<vmem>>, vector<1x4x224xf32>
    %1 = vector.shape_cast %0 : vector<1x4x224xf32> to vector<4x224xf32>
    %c0_2 = arith.constant 0 : index
    %c0_3 = arith.constant 0 : index
    %c1 = arith.constant 1 : index
    %2 = vector.load %arg3[%c0_2, %c0_3, %c1] : memref<1x4x272xf32, #tpu.memory_space<vmem>>, vector<1x4x224xf32>
    %3 = vector.shape_cast %2 : vector<1x4x224xf32> to vector<4x224xf32>
    %c0_4 = arith.constant 0 : index
    %c0_5 = arith.constant 0 : index
    %c2 = arith.constant 2 : index
    %4 = vector.load %arg3[%c0_4, %c0_5, %c2] : memref<1x4x272xf32, #tpu.memory_space<vmem>>, vector<1x4x224xf32>
    %5 = vector.shape_cast %4 : vector<1x4x224xf32> to vector<4x224xf32>
    %c0_6 = arith.constant 0 : index
    %c0_7 = arith.constant 0 : index
    %c16 = arith.constant 16 : index
    %6 = vector.load %arg3[%c0_6, %c0_7, %c16] : memref<1x4x272xf32, #tpu.memory_space<vmem>>, vector<1x4x224xf32>
    %7 = vector.shape_cast %6 : vector<1x4x224xf32> to vector<4x224xf32>
    %c0_8 = arith.constant 0 : index
    %c0_9 = arith.constant 0 : index
    %c17 = arith.constant 17 : index
    %8 = vector.load %arg3[%c0_8, %c0_9, %c17] : memref<1x4x272xf32, #tpu.memory_space<vmem>>, vector<1x4x224xf32>
    %9 = vector.shape_cast %8 : vector<1x4x224xf32> to vector<4x224xf32>
    %c0_10 = arith.constant 0 : index
    %c0_11 = arith.constant 0 : index
    %c18 = arith.constant 18 : index
    %10 = vector.load %arg3[%c0_10, %c0_11, %c18] : memref<1x4x272xf32, #tpu.memory_space<vmem>>, vector<1x4x224xf32>
    %11 = vector.shape_cast %10 : vector<1x4x224xf32> to vector<4x224xf32>
    %c0_12 = arith.constant 0 : index
    %c0_13 = arith.constant 0 : index
    %c32 = arith.constant 32 : index
    %12 = vector.load %arg3[%c0_12, %c0_13, %c32] : memref<1x4x272xf32, #tpu.memory_space<vmem>>, vector<1x4x224xf32>
    %13 = vector.shape_cast %12 : vector<1x4x224xf32> to vector<4x224xf32>
    %c0_14 = arith.constant 0 : index
    %c0_15 = arith.constant 0 : index
    %c33 = arith.constant 33 : index
    %14 = vector.load %arg3[%c0_14, %c0_15, %c33] : memref<1x4x272xf32, #tpu.memory_space<vmem>>, vector<1x4x224xf32>
    %15 = vector.shape_cast %14 : vector<1x4x224xf32> to vector<4x224xf32>
    %c0_16 = arith.constant 0 : index
    %c0_17 = arith.constant 0 : index
    %c34 = arith.constant 34 : index
    %16 = vector.load %arg3[%c0_16, %c0_17, %c34] : memref<1x4x272xf32, #tpu.memory_space<vmem>>, vector<1x4x224xf32>
    %17 = vector.shape_cast %16 : vector<1x4x224xf32> to vector<4x224xf32>
    %18 = tpu.concatenate %1, %3, %5, %7, %9, %11, %13, %15, %17 in 0 : vector<4x224xf32>, vector<4x224xf32>, vector<4x224xf32>, vector<4x224xf32>, vector<4x224xf32>, vector<4x224xf32>, vector<4x224xf32>, vector<4x224xf32>, vector<4x224xf32> -> vector<36x224xf32>
    %c0_18 = arith.constant 0 : index
    %c0_19 = arith.constant 0 : index
    %19 = vector.load %arg1[%c0_18, %c0_19] : memref<8x36xf32, #tpu.memory_space<vmem>>, vector<8x36xf32>
    %cst = arith.constant dense<0.000000e+00> : vector<8x224xf32>
    %20 = tpu.matmul %19, %18, %cst {dimension_numbers = #tpu.dot_dimension_numbers<[1], [0], [0], [1], [0, 0, 1, 1], [], []>} : vector<8x36xf32>, vector<36x224xf32>, vector<8x224xf32> -> vector<8x224xf32>
    %c0_20 = arith.constant 0 : index
    %c0_21 = arith.constant 0 : index
    %21 = vector.load %arg2[%c0_20, %c0_21] : memref<8x1xf32, #tpu.memory_space<vmem>>, vector<8x1xf32>
    %22 = vector.broadcast %21 : vector<8x1xf32> to vector<8x224xf32>
    %23 = arith.addf %20, %22 : vector<8x224xf32>
    %c0_22 = arith.constant 0 : index
    %c0_23 = arith.constant 0 : index
    %c0_24 = arith.constant 0 : index
    %24 = vector.load %arg4[%c0_22, %c0_23, %c0_24] : memref<1x8x224xf32, #tpu.memory_space<vmem>>, vector<1x8x224xf32>
    %25 = vector.shape_cast %24 : vector<1x8x224xf32> to vector<8x224xf32>
    %26 = vector.shape_cast %23 : vector<8x224xf32> to vector<1x8x224xf32>
    tpu.vector_store %arg4[%c0_22, %c0_23, %c0_24], %26 {strides = array<i32>} : memref<1x8x224xf32, #tpu.memory_space<vmem>>, vector<1x8x224xf32>,
    return
  }
  func.func @transform_0(%arg0: i32) -> (i32, i32) {
    %c0_i32 = arith.constant 0 : i32
    %c0_i32_0 = arith.constant 0 : i32
    %c0_i32_1 = arith.constant 0 : i32
    return %c0_i32, %c0_i32_0 : i32, i32
  }
  func.func @transform_1(%arg0: i32) -> (i32, i32) {
    %c0_i32 = arith.constant 0 : i32
    %c0_i32_0 = arith.constant 0 : i32
    %c0_i32_1 = arith.constant 0 : i32
    return %c0_i32, %c0_i32_0 : i32, i32
  }
  func.func @transform_2(%arg0: i32) -> (i32, i32, i32) {
    %c0_i32 = arith.constant 0 : i32
    %c0_i32_0 = arith.constant 0 : i32
    %c0_i32_1 = arith.constant 0 : i32
    return %arg0, %c0_i32, %c0_i32_0 : i32, i32, i32
  }
  func.func @transform_3(%arg0: i32) -> (i32, i32, i32) {
    %c0_i32 = arith.constant 0 : i32
    %c0_i32_0 = arith.constant 0 : i32
    %c0_i32_1 = arith.constant 0 : i32
    return %arg0, %c0_i32, %c0_i32_0 : i32, i32, i32
  }
}

</mosaic_0001>

<llo_original>
// kernel: tpu_custom_call.1
$region0: #{tpu_custom_call.1}
  #allocation0 [shape = 'u32[]', space=smem, size = 0x4, offset = 0x4, fixed_abs, tag = 'smem constant byte address 0x4 - core index']
  #allocation1 [shape = 'u32[144,128]{1,0:T(1,128)}', space=vmem, size = 0x12000, scoped, tag = 'internal scratch']
  %s0 = inlined_call_operand.vmem [shape: f32[8,36], index: 0, kind: input, shape index: {}]
  %s1 = inlined_call_operand.vmem [shape: f32[8,1], index: 1, kind: input, shape index: {}]
  %s2 = inlined_call_operand.hbm [shape: f32[2,4,272], index: 2, kind: input, shape index: {}]
  %s3 = inlined_call_operand.hbm [shape: f32[2,8,224], index: 3, kind: output, shape index: {}]
  %s4 = sld [smem:[#allocation0]]
  $region49: #{tpu_custom_call.1} parent=0
    _
  %s6 = ssub.s32 1, %s4
  %s7 = scalar_select 0, %s6, %s4
  $region1: #{tpu_custom_call.1} parent=0
    #allocation2 [shape = 'u8[12288]{0}', space=vmem, size = 0x3000, scoped, tag = 'input window, operand 2']
    #allocation3 [shape = 's32[2]{0}', space=sflag, size = 0x8, scoped, tag = 'scoped memory for tpu_custom_call.1']
    #allocation4 [shape = 's32[2]{0}', space=sflag, size = 0x8, scoped, tag = 'scoped memory for tpu_custom_call.1']
    #allocation5 [shape = 'u8[16384]{0}', space=vmem, size = 0x4000, scoped, tag = 'output window, operand 0']
    %8 = vsyncpa [#allocation3], 0
    %s9 = scalar_lea.sflag [#allocation3], 1
    %10 = vsyncpa %s9, 0
    %11 = vsyncpa [#allocation4], 0
    %s12 = scalar_lea.sflag [#allocation4], 1
    %13 = vsyncpa %s12, 0
    loop: start=0, step=1, limit=4
    $region2: #{tpu_custom_call.1} parent=1 // loop_pre_header
      _
    $region3: #{tpu_custom_call.1} parent=1 // loop_header
      %s15 = sphi 0, %s19
      %p16 = scmp.ge.s32.totalorder %s15, 4
      %s23 = sphi 0, %s23
      %s25 = sphi 0, %s23
      %s26 = sphi 0, %s25
      %s40 = sphi 0, %s26
      %s44 = sphi 0, %s44
      %s46 = sphi 0, %s44
      %s47 = sphi 0, %s46
      %s61 = sphi 0, %s47
      %s67 = sphi 0, %s69
      %s70 = sphi 0, %s67
      %s71 = sphi 0, %s70
      %s87 = sphi 0, %s71
      %s93 = sphi 0, %s95
      %s96 = sphi 0, %s93
      %s97 = sphi 0, %s96
      %s113 = sphi 0, %s97
    $region4: #{tpu_custom_call.1} parent=1 // loop_header_branch
      %18 = sbr.rel (%p16) target = $region8
    $region5: #{tpu_custom_call.1} parent=1 // loop_body
      %s20 = ssub.s32 %s15, 1
      %s21 = ssub.s32 %s15, 2
      %s22 = sadd.s32 %s15, 1
      %s24 = sadd.s32 %s23, 1
      %p27 = scmp.eq.s32.totalorder %s15, 1
      %p28 = scmp.ne.s32.totalorder %s23, %s25
      %p29 = scmp.eq.s32.totalorder %s15, 0
      %p30 = por %p28, %p29
      %p31 = scmp.ne.s32.totalorder %s23, %s25
      %p32 = scmp.eq.s32.totalorder %s20, 1
      %p33 = por %p31, %p32
      %p34 = scmp.ne.s32.totalorder %s25, %s26
      %p35 = scmp.eq.s32.totalorder %s20, 0
      %p36 = por %p34, %p35
      %p37 = scmp.ne.s32.totalorder %s25, %s26
      %p38 = scmp.eq.s32.totalorder %s21, 1
      %p39 = por %p37, %p38
      %p41 = scmp.ne.s32.totalorder %s26, %s40
      %p42 = scmp.eq.s32.totalorder %s21, 0
      %p43 = por %p41, %p42
      %s45 = sadd.s32 %s44, 1
      %p48 = scmp.eq.s32.totalorder %s15, 1
      %p49 = scmp.ne.s32.totalorder %s44, %s46
      %p50 = scmp.eq.s32.totalorder %s15, 0
      %p51 = por %p49, %p50
      %p52 = scmp.ne.s32.totalorder %s44, %s46
      %p53 = scmp.eq.s32.totalorder %s20, 1
      %p54 = por %p52, %p53
      %p55 = scmp.ne.s32.totalorder %s46, %s47
      %p56 = scmp.eq.s32.totalorder %s20, 0
      %p57 = por %p55, %p56
      %p58 = scmp.ne.s32.totalorder %s46, %s47
      %p59 = scmp.eq.s32.totalorder %s21, 1
      %p60 = por %p58, %p59
      %p62 = scmp.ne.s32.totalorder %s47, %s61
      %p63 = scmp.eq.s32.totalorder %s21, 0
      %p64 = por %p62, %p63
      %s65 = ssub.s32 %s15, %s22
      %p66 = scmp.eq.s32.totalorder %s65, 0
      %s68 = sadd.s32 %s67, 1
      %s69 = scalar_select %p66, %s67, %s68
      %p72 = pneg %p66
      %p73 = scmp.eq.s32.totalorder %s15, 1
      %p74 = por %p72, %p73
      %p75 = scmp.ne.s32.totalorder %s67, %s70
      %p76 = scmp.eq.s32.totalorder %s15, 0
      %p77 = por %p75, %p76
      %p78 = scmp.ne.s32.totalorder %s67, %s70
      %p79 = scmp.eq.s32.totalorder %s20, 1
      %p80 = por %p78, %p79
      %p81 = scmp.ne.s32.totalorder %s70, %s71
      %p82 = scmp.eq.s32.totalorder %s20, 0
      %p83 = por %p81, %p82
      %p84 = scmp.ne.s32.totalorder %s70, %s71
      %p85 = scmp.eq.s32.totalorder %s21, 1
      %p86 = por %p84, %p85
      %p88 = scmp.ne.s32.totalorder %s71, %s87
      %p89 = scmp.eq.s32.totalorder %s21, 0
      %p90 = por %p88, %p89
      %s91 = ssub.s32 %s15, %s22
      %p92 = scmp.eq.s32.totalorder %s91, 0
      %s94 = sadd.s32 %s93, 1
      %s95 = scalar_select %p92, %s93, %s94
      %p98 = pneg %p92
      %p99 = scmp.eq.s32.totalorder %s15, 1
      %p100 = por %p98, %p99
      %p101 = scmp.ne.s32.totalorder %s93, %s96
      %p102 = scmp.eq.s32.totalorder %s15, 0
      %p103 = por %p101, %p102
      %p104 = scmp.ne.s32.totalorder %s93, %s96
      %p105 = scmp.eq.s32.totalorder %s20, 1
      %p106 = por %p104, %p105
      %p107 = scmp.ne.s32.totalorder %s96, %s97
      %p108 = scmp.eq.s32.totalorder %s20, 0
      %p109 = por %p107, %p108
      %p110 = scmp.ne.s32.totalorder %s96, %s97
      %p111 = scmp.eq.s32.totalorder %s21, 1
      %p112 = por %p110, %p111
      %p114 = scmp.ne.s32.totalorder %s97, %s113
      %p115 = scmp.eq.s32.totalorder %s21, 0
      %p116 = por %p114, %p115
      %p117 = scmp.le.s32.totalorder 1, %s15
      %p118 = scmp.lt.s32.totalorder %s15, 3
      %p119 = pnand %p117, %p118
      %p120 = pneg %p119
      // Predicated region
      $region9: #{tpu_custom_call.1} parent=5 // pred_check
        _
      $region10: #{tpu_custom_call.1} parent=5 // pred_check_branch
        %122 = sbr.rel (%p119) target = $region12
      $region11: #{tpu_custom_call.1} parent=5 // pred_region
        %s123 = ssub.s32 %s15, 1
        // Predicated region
        $region13: #{tpu_custom_call.1} parent=11 // pred_check
          %p124 = pneg %p36
        $region14: #{tpu_custom_call.1} parent=11 // pred_check_branch
          %126 = sbr.rel (%p124) target = $region16
        $region15: #{tpu_custom_call.1} parent=11 // pred_region
          _
        $region16: #{tpu_custom_call.1} parent=11 // pred_fallthru
          _
        // Predicated region
        $region17: #{tpu_custom_call.1} parent=11 // pred_check
          %p127 = pneg %p57
        $region18: #{tpu_custom_call.1} parent=11 // pred_check_branch
          %129 = sbr.rel (%p127) target = $region20
        $region19: #{tpu_custom_call.1} parent=11 // pred_region
          _
        $region20: #{tpu_custom_call.1} parent=11 // pred_fallthru
          _
      $region12: #{tpu_custom_call.1} parent=5 // pred_fallthru
        _
      %p130 = scmp.lt.s32.totalorder %s15, 2
      // Predicated region
      $region21: #{tpu_custom_call.1} parent=5 // pred_check
        %p131 = pneg %p130
      $region22: #{tpu_custom_call.1} parent=5 // pred_check_branch
        %133 = sbr.rel (%p131) target = $region24
      $region23: #{tpu_custom_call.1} parent=5 // pred_region
        // Predicated region
        $region25: #{tpu_custom_call.1} parent=23 // pred_check
          %p134 = pneg %p77
        $region26: #{tpu_custom_call.1} parent=23 // pred_check_branch
          %136 = sbr.rel (%p134) target = $region28
        $region27: #{tpu_custom_call.1} parent=23 // pred_region
          %s137 = sand.u32 %s67, 1
          %s138 = scalar_lea.sflag [#allocation3], %s137
          %s139 = sand.u32 %s67, 1
          %s140 = smul.addr %s139, 12
          %s141 = scalar_lea.vmem [#allocation2], %s140
          %s143 = ssub.s32 192, 192
          %144 = vsyncadd %s138, %s143
          %s145 = smul.addr %s15, 3
          %s146 = smul.addr %s145, 64
          %s147 = scalar_lea.hbm %s2, %s146
          %s149 = sshll.u32 %s141, 4
          %s150 = int_to_ptr.vmem [resolvable:$true] %s149
          %152 = dma.hbm_to_vmem [thread:$0]  %s147, 192, %s150, %s138
        $region28: #{tpu_custom_call.1} parent=23 // pred_fallthru
          _
      $region24: #{tpu_custom_call.1} parent=5 // pred_fallthru
        _
      %p153 = scmp.le.s32.totalorder 1, %s15
      %p154 = scmp.lt.s32.totalorder %s15, 3
      %p155 = pnand %p153, %p154
      %p156 = pneg %p155
      // Predicated region
      $region29: #{tpu_custom_call.1} parent=5 // pred_check
        _
      $region30: #{tpu_custom_call.1} parent=5 // pred_check_branch
        %158 = sbr.rel (%p155) target = $region32
      $region31: #{tpu_custom_call.1} parent=5 // pred_region
        %s159 = ssub.s32 %s15, 1
        %s160 = sand.u32 %s70, 1
        %s161 = scalar_lea.sflag [#allocation3], %s160
        %s162 = sand.u32 %s70, 1
        %s163 = smul.addr %s162, 12
        %s164 = scalar_lea.vmem [#allocation2], %s163
        // Predicated region
        $region33: #{tpu_custom_call.1} parent=31 // pred_check
          %p165 = pneg %p83
        $region34: #{tpu_custom_call.1} parent=31 // pred_check_branch
          %167 = sbr.rel (%p165) target = $region36
        $region35: #{tpu_custom_call.1} parent=31 // pred_region
          %168 = dma.done %s161, 192
        $region36: #{tpu_custom_call.1} parent=31 // pred_fallthru
          _
        %p169 = pneg %p36
        %p170 = pneg %p33
        %p171 = pneg %p57
        %p172 = pneg %p54
        %s173 = sand.u32 %s70, 1
        %s174 = scalar_lea.sflag [#allocation3], %s173
        %s175 = sand.u32 %s70, 1
        %s176 = smul.addr %s175, 12
        %s177 = scalar_lea.vmem [#allocation2], %s176
        %p178 = pneg %p83
        %p179 = pneg %p80
        %p180 = pneg %p109
        %p181 = pneg %p106
        %s182 = sand.u32 %s96, 1
        %s183 = scalar_lea.sflag [#allocation4], %s182
        %s184 = sand.u32 %s96, 1
        %s185 = smul.addr %s184, 16
        %s186 = scalar_lea.vmem [#allocation5], %s185
        %v187 = vld [vmem:[%s164] sm:$0xff]
        %v188 = vld [vmem:[%s164 + $0x8] sm:$0xf]
        %v190 = vcombine.high %v187, %v187
        %v192 = vcombine.low %v187, %v187
        %193 = vrot.lane.b32.xlu0 %v192, 127
        %v194 = vpop.permute.xlu0 %193
        %195 = vrot.lane.b32.xlu0 %v187, 127
        %v196 = vpop.permute.xlu0 %195
        %vm197 = vcmask 1039360
        %v198 = vsel %vm197, %v194, %v196
        %201 = vrot.lane.b32.xlu0 %v187, 126
        %v202 = vpop.permute.xlu0 %201
        %203 = vrot.lane.b32.xlu0 %v190, 126
        %v204 = vpop.permute.xlu0 %203
        %vm205 = vcmask 1031168
        %v206 = vsel %vm205, %v202, %v204
        %209 = vrot.lane.b32.xlu0 %v192, 112
        %v210 = vpop.permute.xlu0 %209
        %211 = vrot.lane.b32.xlu0 %v187, 112
        %v212 = vpop.permute.xlu0 %211
        %vm213 = vcmask 916480
        %v214 = vsel %vm213, %v210, %v212
        %217 = vrot.lane.b32.xlu0 %v187, 111
        %v218 = vpop.permute.xlu0 %217
        %219 = vrot.lane.b32.xlu0 %v190, 111
        %v220 = vpop.permute.xlu0 %219
        %vm221 = vcmask 908288
        %v222 = vsel %vm221, %v218, %v220
        %225 = vrot.lane.b32.xlu0 %v192, 110
        %v226 = vpop.permute.xlu0 %225
        %227 = vrot.lane.b32.xlu0 %v187, 110
        %v228 = vpop.permute.xlu0 %227
        %vm229 = vcmask 900096
        %v230 = vsel %vm229, %v226, %v228
        %233 = vrot.lane.b32.xlu0 %v187, 96
        %v234 = vpop.permute.xlu0 %233
        %235 = vrot.lane.b32.xlu0 %v190, 96
        %v236 = vpop.permute.xlu0 %235
        %vm237 = vcmask 785408
        %v238 = vsel %vm237, %v234, %v236
        %v242 = vcombine.low %v188, %v188
        %243 = vrot.lane.b32.xlu0 %v192, 95
        %v244 = vpop.permute.xlu0 %243
        %245 = vrot.lane.b32.xlu0 %v187, 95
        %v246 = vpop.permute.xlu0 %245
        %247 = vrot.lane.b32.xlu0 %v242, 95
        %v248 = vpop.permute.xlu0 %247
        %vm249 = vcmask 777216
        %v250 = vsel %vm249, %v244, %v246
        %v251 = vsel %vm249, %v246, %v248
        %254 = vrot.lane.b32.xlu0 %v187, 94
        %v255 = vpop.permute.xlu0 %254
        %256 = vrot.lane.b32.xlu0 %v190, 94
        %v257 = vpop.permute.xlu0 %256
        %258 = vrot.lane.b32.xlu0 %v188, 94
        %v259 = vpop.permute.xlu0 %258
        %vm260 = vcmask 769024
        %v261 = vsel %vm260, %v255, %v257
        %v262 = vsel %vm260, %v257, %v259
        %vm263 = vcmask 1043456
        %v264 = vsel %vm263, %v187, %v198
        %v265 = vsel %vm263, %v190, %v196
        %v266 = vsel %vm263, %v206, %v214
        %v267 = vsel %vm263, %v204, %v212
        %v268 = vsel %vm263, %v222, %v230
        %v269 = vsel %vm263, %v220, %v228
        %v270 = vsel %vm263, %v238, %v250
        %v271 = vsel %vm263, %v236, %v251
        %v272 = vld [vmem:[%s0] sm:$0xff]
        %v273 = vld [vmem:[%s1] sm:$0xff]
        %275 = vset.pattern.permute.xlu0 0
        %276 = vperm.xlu0 %275, %v273
        %v277 = vpop.permute.xlu0 %276
        %vm279 = vcmask 293888
        %v281 = vsel %vm279, %v272, 0
        %v283 = vsel %vm263, %v261, 0
        %v285 = vsel %vm263, %v262, 0
        %287 = vmatprep.subr.mxu0 %v265
        %288 = vmatpush1.msra.mxu0 %v264
        %289 = vmatprep.subr.mxu0 %v267
        %290 = vmatpush1.msra.mxu0 %v266
        %291 = vmatprep.subr.mxu0 %v269
        %292 = vmatpush1.msra.mxu0 %v268
        %293 = vmatprep.subr.mxu0 %v271
        %294 = vmatpush1.msra.mxu0 %v270
        %295 = vmatprep.subr.mxu0 %v285
        %296 = vmatpush1.msra.mxu0 %v283
        %297 = vmatprep.subr.mxu0 0.0
        %298 = vmatpush1.msra.mxu0 0.0
        %299 = vmatprep.subr.mxu0 0.0
        %300 = vmatpush1.msra.mxu0 0.0
        %301 = vmatprep.subr.mxu0 0.0
        %302 = vmatpush1.msra.mxu0 0.0
        %303 = vmatprep.subr.mxu0 0.0
        %304 = vmatpush1.msra.mxu0 0.0
        %305 = vmatprep.subr.mxu0 0.0
        %306 = vmatpush1.msra.mxu0 0.0
        %307 = vmatprep.subr.mxu0 0.0
        %308 = vmatpush1.msra.mxu0 0.0
        %309 = vmatprep.subr.mxu0 0.0
        %310 = vmatpush1.msra.mxu0 0.0
        %311 = vmatprep.subr.mxu0 0.0
        %312 = vmatpush1.msra.mxu0 0.0
        %313 = vmatprep.subr.mxu0 0.0
        %314 = vmatpush1.msra.mxu0 0.0
        %315 = vmatprep.subr.mxu0 0.0
        %316 = vmatpush1.msra.mxu0 0.0
        %317 = vmatprep.subr.mxu0 0.0
        %318 = vmatpush1.msra.mxu0 0.0
        %319 = vmatprep.subr.mxu0 0.0
        %320 = vmatpush1.msra.mxu0 0.0
        %321 = vmatprep.subr.mxu0 0.0
        %322 = vmatpush1.msra.mxu0 0.0
        %323 = vmatprep.subr.mxu0 0.0
        %324 = vmatpush1.msra.mxu0 0.0
        %325 = vmatprep.subr.mxu0 0.0
        %326 = vmatpush1.msra.mxu0 0.0
        %327 = vmatprep.subr.mxu0 0.0
        %328 = vmatpush1.msra.mxu0 0.0
        %329 = vmatprep.subr.mxu0 0.0
        %330 = vmatpush1.msra.mxu0 0.0
        %331 = vmatprep.subr.mxu0 0.0
        %332 = vmatpush1.msra.mxu0 0.0
        %333 = vmatprep.subr.mxu0 0.0
        %334 = vmatpush1.msra.mxu0 0.0
        %335 = vmatprep.subr.mxu0 0.0
        %336 = vmatpush1.msra.mxu0 0.0
        %337 = vmatprep.subr.mxu0 0.0
        %338 = vmatpush1.msra.mxu0 0.0
        %339 = vmatprep.subr.mxu0 0.0
        %340 = vmatpush1.msra.mxu0 0.0
        %341 = vmatprep.subr.mxu0 0.0
        %342 = vmatpush1.msra.mxu0 0.0
        %343 = vmatprep.subr.mxu0 0.0
        %344 = vmatpush1.msra.mxu0 0.0
        %345 = vmatprep.subr.mxu0 0.0
        %346 = vmatpush1.msra.mxu0 0.0
        %347 = vmatprep.subr.mxu0 0.0
        %348 = vmatpush1.msra.mxu0 0.0
        %349 = vmatprep.subr.mxu0 0.0
        %350 = vmatpush1.msra.mxu0 0.0
        %351 = vmatprep.mubr.f32.mxu0 0.0
        %352 = vmatmul.mubr.f32.gmra.mrb[0].mxu0 %v281
        %v353 = vpop.f32.mrb[0].mxu0
        %v354 = vadd.f32 %v277, %v353
        %v355 = vpop.f32.mrb[0].mxu0
        %v356 = vadd.f32 %v277, %v355
        %357 = vdwg.mxu0
        %358 = vst [vmem:[%s186] sm:$0xff] %v354
        %359 = vst.msk [vmem:[%s186 + $0x8] sm:$0xff] %vm237, %v356
        %s360 = sand.u32 %s96, 1
        %s361 = scalar_lea.sflag [#allocation4], %s360
        %s362 = sand.u32 %s96, 1
        %s363 = smul.addr %s362, 16
        %s364 = scalar_lea.vmem [#allocation5], %s363
        // Predicated region
        $region37: #{tpu_custom_call.1} parent=31 // pred_check
          %p365 = pneg %p106
        $region38: #{tpu_custom_call.1} parent=31 // pred_check_branch
          %367 = sbr.rel (%p365) target = $region40
        $region39: #{tpu_custom_call.1} parent=31 // pred_region
          %s369 = ssub.s32 256, 256
          %370 = vsyncadd %s361, %s369
          %s371 = smul.addr %s20, 2
          %s372 = smul.addr %s371, 128
          %s373 = scalar_lea.hbm %s3, %s372
          %s375 = sshll.u32 %s364, 4
          %s376 = int_to_ptr.vmem [resolvable:$true] %s375
          %378 = dma.vmem_to_hbm [thread:$0]  %s376, 256, %s373, %s361
        $region40: #{tpu_custom_call.1} parent=31 // pred_fallthru
          _
      $region32: #{tpu_custom_call.1} parent=5 // pred_fallthru
        _
      %p379 = scmp.le.s32.totalorder 2, %s15
      // Predicated region
      $region41: #{tpu_custom_call.1} parent=5 // pred_check
        %p380 = pneg %p379
      $region42: #{tpu_custom_call.1} parent=5 // pred_check_branch
        %382 = sbr.rel (%p380) target = $region44
      $region43: #{tpu_custom_call.1} parent=5 // pred_region
        %s383 = ssub.s32 %s15, 2
        // Predicated region
        $region45: #{tpu_custom_call.1} parent=43 // pred_check
          %p384 = pneg %p112
        $region46: #{tpu_custom_call.1} parent=43 // pred_check_branch
          %386 = sbr.rel (%p384) target = $region48
        $region47: #{tpu_custom_call.1} parent=43 // pred_region
          %s387 = sand.u32 %s97, 1
          %s388 = scalar_lea.sflag [#allocation4], %s387
          %s389 = sand.u32 %s97, 1
          %s390 = smul.addr %s389, 16
          %s391 = scalar_lea.vmem [#allocation5], %s390
          %392 = dma.done %s388, 256
        $region48: #{tpu_custom_call.1} parent=43 // pred_fallthru
          _
      $region44: #{tpu_custom_call.1} parent=5 // pred_fallthru
        _
    $region6: #{tpu_custom_call.1} parent=1 // loop_footer
      %s19 = sadd.s32 1, %s15
    $region7: #{tpu_custom_call.1} parent=1 // loop_footer_branch
      %14 = sbr.rel target = $region3
    $region8: #{tpu_custom_call.1} parent=1 // loop_exit
      _
    %393 = vsyncpa [#allocation3], 1
    %s394 = scalar_lea.sflag [#allocation3], 1
    %395 = vsyncpa %s394, 1
    %396 = vsyncpa [#allocation4], 1
    %s397 = scalar_lea.sflag [#allocation4], 1
    %398 = vsyncpa %s397, 1

</llo_original>
